<compile_context>
chip_gen: v7x
topology: tpu7x:2x2x1
jax: 0.10.0
libtpu: 0.0.40
codegen_flags: <defaults>
</compile_context>

<pallas_src>
import functools

import jax
import jax.numpy as jnp
from jax import lax
from jax.experimental import pallas as pl
from jax.experimental.pallas import tpu as pltpu


def _round_up(x, m):
    return (x + m - 1) // m * m


def _pick_hw_tile(total, max_tile=512, align=128):
    """Largest spatial tile <= max_tile that divides `total` and is a multiple
    of `align`, falling back to the full extent."""
    if total <= max_tile:
        return total
    t = (max_tile // align) * align
    while t >= align:
        if total % t == 0:
            return t
        t -= align
    return total


def _pick_batch_tile(B, cap):
    """Largest batch tile <= cap that divides B and is a multiple of 8,
    falling back to the full batch."""
    if B <= cap:
        return B
    bt = (min(cap, B) // 8) * 8
    while bt >= 8:
        if B % bt == 0:
            return bt
        bt -= 8
    return B


def _multist_kernel(feat_ref, fc_ref, colnorm_ref, w_ref, tgt_ref,
                    logit_ref, loss_ref, pool_ref,
                    *, cN, cNp, K, la, gamma, margin):
    h = pl.program_id(1)           # head (reduction axis, "arbitrary")
    s = pl.program_id(2)           # spatial tile (reduction axis, "arbitrary")
    n_s = pl.num_programs(2)

    # Output accumulators stay resident across (h, s) because their index_map
    # ignores those axes; zero them once per batch tile.
    @pl.when(jnp.logical_and(h == 0, s == 0))
    def _():
        logit_ref[...] = jnp.zeros_like(logit_ref)
        loss_ref[...] = jnp.zeros_like(loss_ref)

    # adaptive_avg_pool2d((1,1)): accumulate the raw spatial sum in f32.  The
    # 1/HW cancels against the L2 row normalization below, so it is never
    # applied; the reduction accumulates in f32 without materializing an
    # upcast copy of the feature tile.
    @pl.when(s == 0)
    def _():
        pool_ref[...] = jnp.zeros_like(pool_ref)

    pool_ref[...] += jnp.sum(feat_ref[...], axis=-1, dtype=jnp.float32)

    @pl.when(s == n_s - 1)
    def _():
        xsum = pool_ref[...]                                       # (Bt, C) f32
        # Both L2 norms are applied to the matmul output; colnorm was
        # precomputed in the wrapper (it only depends on fc).
        rownorm = lax.rsqrt(jnp.sum(xsum * xsum, axis=-1, keepdims=True) + 1e-12)
        fc = fc_ref[...]                                           # (C, K*cNp)
        raw = jnp.dot(xsum.astype(fc.dtype), fc,
                      preferred_element_type=jnp.float32)          # (Bt, K*cNp)
        sim_all = raw * rownorm * colnorm_ref[...]                 # (Bt, K*cNp)

        # Softmax over the K sub-centers.  Each sub-center block is cNp
        # (128-aligned) lanes wide, so the per-k slices are whole-vreg views:
        # no cross-lane stack / relayout temp.
        sims = [sim_all[:, k * cNp:(k + 1) * cNp] for k in range(K)]
        m = sims[0]
        for k in range(1, K):
            m = jnp.maximum(m, sims[k])
        num = jnp.zeros_like(m)
        den = jnp.zeros_like(m)
        for k in range(K):
            e = jnp.exp(gamma * (sims[k] - m))
            den = den + e
            num = num + sims[k] * e
        # NOTE: pl.reciprocal(den, approx=True) would move this divide to the
        # EUP, but its approximation error is amplified by `la` in the loss
        # and breaks f32 parity with the reference, so the exact divide is
        # kept here.
        sim_class = num / den                                      # (Bt, cNp)

        # one-hot target built in-kernel; padded classes masked out of the CE
        classes = lax.broadcasted_iota(jnp.int32, sim_class.shape, 1)
        onehot = (classes == tgt_ref[...]).astype(jnp.float32)
        logits = la * (sim_class - margin * onehot)
        logits = jnp.where(classes < cN, logits, -1e30)
        mx = jnp.max(logits, axis=-1, keepdims=True)
        lse = jnp.log(jnp.sum(jnp.exp(logits - mx), axis=-1, keepdims=True)) + mx
        loss_h = lse - jnp.sum(logits * onehot, axis=-1, keepdims=True)   # (Bt,1)

        w_h = w_ref[...]                                           # (Bt, 1)
        logit_ref[...] += w_h * sim_class
        loss_ref[...] += w_h * loss_h


def multist_nl_weight_forward(head_features, nl_logits, targets, fcs, *,
                              cN, K, la, gamma, margin,
                              compute_dtype=jnp.float32,
                              b_tile=None, hw_tile=None):
    """head_features: list of (B, C, H, W); nl_logits: list of (B, 1);
    targets: list of (B,) int; fcs: list of (C, K*cN) SoftTriple centers
    (sub-center-major columns).  Returns (final_loss, final_logit)."""
    plen = len(head_features)
    B, C = head_features[0].shape[:2]
    feats3 = [f.reshape(f.shape[0], f.shape[1], -1) for f in head_features]
    HW = feats3[0].shape[-1]
    cNp = _round_up(cN, 128)

    # ---- wrapper-side (XLA) prep: weight-only / O(B*plen) work -------------
    # One stacked HBM slab so the head axis can be a pipelined grid axis.
    feats = jnp.stack(feats3, axis=0)                              # (plen,B,C,HW)

    # Per-head fc, each sub-center block zero-padded to 128-lane alignment.
    fc_p = jnp.stack(
        [jnp.pad(fc.astype(jnp.float32).reshape(C, K, cN),
                 ((0, 0), (0, 0), (0, cNp - cN))).reshape(C, K * cNp)
         for fc in fcs], axis=0)                                   # (plen,C,K*cNp)
    col_sq = jnp.sum(fc_p * fc_p, axis=1, keepdims=True)           # (plen,1,K*cNp)
    colnorm = jnp.where(col_sq > 0, lax.rsqrt(col_sq + 1e-12), 0.0)
    fc_p = fc_p.astype(compute_dtype)

    # Head-weight softmax stays in XLA; the BlockSpec delivers w[:, h] per
    # grid step so the kernel never slices the head axis on lanes.
    w = jax.nn.softmax(jnp.concatenate(nl_logits, axis=1).astype(jnp.float32),
                       axis=1)                                     # (B, plen)
    w_t = w.T.reshape(plen, B, 1)
    tgt = jnp.stack(targets, axis=0).astype(jnp.int32).reshape(plen, B, 1)

    # ---- tiling -------------------------------------------------------------
    if hw_tile is None:
        hw_tile = _pick_hw_tile(HW)
    if b_tile is None:
        feat_row_bytes = C * hw_tile * feats.dtype.itemsize
        b_cap = max(8, (6 * 1024 * 1024) // max(1, feat_row_bytes))
        b_tile = _pick_batch_tile(B, min(b_cap, 256))
    nb = B // b_tile
    n_hw = HW // hw_tile
    grid = (nb, plen, n_hw)

    feat_spec = pl.BlockSpec((pl.Squeezed(), b_tile, C, hw_tile),
                             lambda b, h, s: (h, b, 0, s))
    fc_spec = pl.BlockSpec((pl.Squeezed(), C, K * cNp), lambda b, h, s: (h, 0, 0))
    cn_spec = pl.BlockSpec((pl.Squeezed(), 1, K * cNp), lambda b, h, s: (h, 0, 0))
    w_spec = pl.BlockSpec((pl.Squeezed(), b_tile, 1), lambda b, h, s: (h, b, 0))
    tgt_spec = pl.BlockSpec((pl.Squeezed(), b_tile, 1), lambda b, h, s: (h, b, 0))
    out_logit_spec = pl.BlockSpec((b_tile, cNp), lambda b, h, s: (b, 0))
    out_loss_spec = pl.BlockSpec((b_tile, 1), lambda b, h, s: (b, 0))

    # Explicit VMEM budget (double-buffered inputs + outputs + scratch + slack).
    feat_blk = b_tile * C * hw_tile * feats.dtype.itemsize
    fc_blk = C * K * cNp * fc_p.dtype.itemsize
    small_blk = (K * cNp + 2 * b_tile) * 4
    out_blk = b_tile * (cNp + 1) * 4
    scratch_blk = b_tile * C * 4
    temps = 4 * b_tile * K * cNp * 4
    est = 2 * (feat_blk + fc_blk + small_blk) + out_blk + scratch_blk + temps
    vmem_limit = int(min(64 * 1024 * 1024, max(32 * 1024 * 1024, 2 * est)))

    kernel = functools.partial(_multist_kernel, cN=cN, cNp=cNp, K=K,
                               la=float(la), gamma=float(gamma),
                               margin=float(margin))

    logit_p, loss_b = pl.pallas_call(
        kernel,
        out_shape=(jax.ShapeDtypeStruct((B, cNp), jnp.float32),
                   jax.ShapeDtypeStruct((B, 1), jnp.float32)),
        grid=grid,
        in_specs=[feat_spec, fc_spec, cn_spec, w_spec, tgt_spec],
        out_specs=(out_logit_spec, out_loss_spec),
        scratch_shapes=[pltpu.VMEM((b_tile, C), jnp.float32)],
        compiler_params=pltpu.CompilerParams(
            dimension_semantics=("parallel", "arbitrary", "arbitrary"),
            vmem_limit_bytes=vmem_limit),
    )(feats, fc_p, colnorm, w_t, tgt)

    final_loss = jnp.mean(loss_b)          # batch mean of head-weighted losses
    final_logit = logit_p[:, :cN]          # drop lane padding
    return final_loss, final_logit


def reference(head_features, nl_logits, targets, fcs, *, cN, K, la, gamma, margin):
    """Pure-JAX f32 reference mirroring the PyTorch forward (tau=0)."""
    plen = len(head_features)
    losses, logits = [], []
    for h in range(plen):
        x = jnp.mean(head_features[h].astype(jnp.float32), axis=(2, 3))
        x = x * lax.rsqrt(jnp.sum(x * x, axis=1, keepdims=True) + 1e-12)
        fch = fcs[h].astype(jnp.float32)
        cen = fch * lax.rsqrt(jnp.sum(fch * fch, axis=0, keepdims=True) + 1e-12)
        sim_all = x @ cen                                            # (B, K*cN)
        sim = sim_all.reshape(x.shape[0], K, cN).transpose(0, 2, 1)  # (B, cN, K)
        p = jax.nn.softmax(sim * gamma, axis=-1)
        sim_class = jnp.sum(p * sim, axis=-1)                        # (B, cN)
        oh = jax.nn.one_hot(targets[h], cN, dtype=jnp.float32)
        lg = la * (sim_class - margin * oh)
        loss = jax.nn.logsumexp(lg, axis=1) - jnp.sum(lg * oh, axis=1)
        losses.append(loss)
        logits.append(sim_class)
    w = jax.nn.softmax(jnp.concatenate(nl_logits, axis=1).astype(jnp.float32), axis=1)
    stack_loss = jnp.stack(losses, axis=1)
    stack_logit = jnp.stack(logits, axis=1)
    final_loss = jnp.mean(jnp.sum(stack_loss * w, axis=1))
    final_logit = jnp.sum(stack_logit * w[:, :, None], axis=1)
    return final_loss, final_logit


if __name__ == "__main__":
    B, C, H, W = 4, 32, 8, 8
    cN, K, plen = 8, 2, 2
    la, gamma, margin = 20.0, 10.0, 0.01   # gamma here is 1/gamma_pt (as in SoftTriple)

    key = jax.random.PRNGKey(0)
    keys = jax.random.split(key, 4 * plen)

    head_features = [jax.random.normal(keys[i], (B, C, H, W), jnp.float32)
                     for i in range(plen)]
    nl_logits = [jax.random.normal(keys[plen + i], (B, 1), jnp.float32)
                 for i in range(plen)]
    targets = [jax.random.randint(keys[2 * plen + i], (B,), 0, cN)
               for i in range(plen)]
    # kaiming_uniform_(a=sqrt(5)) over fc of shape (dim, cN*K): bound = 1/sqrt(dim)
    bound = 1.0 / (C ** 0.5)
    fcs = [jax.random.uniform(keys[3 * plen + i], (C, K * cN), jnp.float32,
                              -bound, bound)
           for i in range(plen)]

    ref_loss, ref_logit = reference(
        head_features, nl_logits, targets, fcs,
        cN=cN, K=K, la=la, gamma=gamma, margin=margin)

    # f32 MXU path: tight parity with the f32 reference.
    loss32, logit32 = multist_nl_weight_forward(
        head_features, nl_logits, targets, fcs,
        cN=cN, K=K, la=la, gamma=gamma, margin=margin,
        compute_dtype=jnp.float32)
    jax.block_until_ready((loss32, logit32))
    assert jnp.allclose(loss32, ref_loss, atol=1e-3, rtol=1e-3), (loss32, ref_loss)
    assert jnp.allclose(logit32, ref_logit, atol=1e-3, rtol=1e-3)

    # Production path: bf16 features / centers on the MXU (f32 accumulation).
    # Looser tolerance covers bf16 input quantization (amplified by la=20).
    feats_bf16 = [f.astype(jnp.bfloat16) for f in head_features]
    loss16, logit16 = multist_nl_weight_forward(
        feats_bf16, nl_logits, targets, fcs,
        cN=cN, K=K, la=la, gamma=gamma, margin=margin,
        compute_dtype=jnp.bfloat16)
    jax.block_until_ready((loss16, logit16))
    assert jnp.allclose(loss16, ref_loss, atol=5e-2, rtol=5e-2), (loss16, ref_loss)
    assert jnp.allclose(logit16, ref_logit, atol=5e-2, rtol=5e-2)

    print("KERNEL_OK")
</pallas_src>

<mosaic_0001>
module attributes {stable_mosaic.version = 11 : i64} {
  func.func @_multist_kernel(%arg0: i32, %arg1: i32, %arg2: i32, %arg3: memref<1x4x32x64xf32, #tpu.memory_space<vmem>>, %arg4: memref<1x32x256xf32, #tpu.memory_space<vmem>>, %arg5: memref<1x1x256xf32, #tpu.memory_space<vmem>>, %arg6: memref<1x4x1xf32, #tpu.memory_space<vmem>>, %arg7: memref<1x4x1xi32, #tpu.memory_space<vmem>>, %arg8: memref<4x128xf32, #tpu.memory_space<vmem>>, %arg9: memref<4x1xf32, #tpu.memory_space<vmem>>, %arg10: memref<4x32xf32, #tpu.memory_space<vmem>>) attributes {dimension_semantics = [#tpu.dimension_semantics<parallel>, #tpu.dimension_semantics<arbitrary>, #tpu.dimension_semantics<arbitrary>], iteration_bounds = array<i64: 1, 2, 1>, scalar_prefetch = 0 : i64, scratch_operands = 1 : i64, tpu.core_type = #tpu.core_type<tc>, window_params = [{transform_indices = @transform_0, window_bounds = array<i64: 1, 4, 32, 64>}, {transform_indices = @transform_1, window_bounds = array<i64: 1, 32, 256>}, {transform_indices = @transform_2, window_bounds = array<i64: 1, 1, 256>}, {transform_indices = @transform_3, window_bounds = array<i64: 1, 4, 1>}, {transform_indices = @transform_4, window_bounds = array<i64: 1, 4, 1>}, {transform_indices = @transform_5, window_bounds = array<i64: 4, 128>}, {transform_indices = @transform_6, window_bounds = array<i64: 4, 1>}]} {
    %c0_i32 = arith.constant 0 : i32
    %0 = arith.cmpi eq, %arg1, %c0_i32 : i32
    %c0_i32_0 = arith.constant 0 : i32
    %1 = arith.cmpi eq, %arg2, %c0_i32_0 : i32
    %2 = arith.andi %0, %1 : i1
    %3 = arith.extui %2 : i1 to i32
    %c0_i32_1 = arith.constant 0 : i32
    %4 = arith.cmpi ne, %3, %c0_i32_1 : i32
    scf.if %4 {
      %cst_13 = arith.constant 0.000000e+00 : f32
      %17 = vector.broadcast %cst_13 : f32 to vector<4x128xf32>
      %c0_14 = arith.constant 0 : index
      %c0_15 = arith.constant 0 : index
      %18 = vector.load %arg8[%c0_14, %c0_15] : memref<4x128xf32, #tpu.memory_space<vmem>>, vector<4x128xf32>
      tpu.vector_store %arg8[%c0_14, %c0_15], %17 {strides = array<i32>} : memref<4x128xf32, #tpu.memory_space<vmem>>, vector<4x128xf32>,
      %cst_16 = arith.constant 0.000000e+00 : f32
      %19 = vector.broadcast %cst_16 : f32 to vector<4x1xf32>
      %c0_17 = arith.constant 0 : index
      %c0_18 = arith.constant 0 : index
      %20 = vector.load %arg9[%c0_17, %c0_18] : memref<4x1xf32, #tpu.memory_space<vmem>>, vector<4x1xf32>
      tpu.vector_store %arg9[%c0_17, %c0_18], %19 {strides = array<i32>} : memref<4x1xf32, #tpu.memory_space<vmem>>, vector<4x1xf32>,
    } else {
    }
    %c0_i32_2 = arith.constant 0 : i32
    %5 = arith.cmpi eq, %arg2, %c0_i32_2 : i32
    %6 = arith.extui %5 : i1 to i32
    %c0_i32_3 = arith.constant 0 : i32
    %7 = arith.cmpi ne, %6, %c0_i32_3 : i32
    scf.if %7 {
      %cst_13 = arith.constant 0.000000e+00 : f32
      %17 = vector.broadcast %cst_13 : f32 to vector<4x32xf32>
      %c0_14 = arith.constant 0 : index
      %c0_15 = arith.constant 0 : index
      %18 = vector.load %arg10[%c0_14, %c0_15] : memref<4x32xf32, #tpu.memory_space<vmem>>, vector<4x32xf32>
      tpu.vector_store %arg10[%c0_14, %c0_15], %17 {strides = array<i32>} : memref<4x32xf32, #tpu.memory_space<vmem>>, vector<4x32xf32>,
    } else {
    }
    %c0 = arith.constant 0 : index
    %c0_4 = arith.constant 0 : index
    %8 = vector.load %arg10[%c0, %c0_4] : memref<4x32xf32, #tpu.memory_space<vmem>>, vector<4x32xf32>
    %c0_5 = arith.constant 0 : index
    %c0_6 = arith.constant 0 : index
    %c0_7 = arith.constant 0 : index
    %c0_8 = arith.constant 0 : index
    %9 = vector.load %arg3[%c0_5, %c0_6, %c0_7, %c0_8] : memref<1x4x32x64xf32, #tpu.memory_space<vmem>>, vector<1x4x32x64xf32>
    %10 = vector.shape_cast %9 : vector<1x4x32x64xf32> to vector<4x32x64xf32>
    %cst = arith.constant dense<0.000000e+00> : vector<4x32xf32>
    %11 = vector.multi_reduction <add>, %10, %cst [2] : vector<4x32x64xf32> to vector<4x32xf32>
    %12 = arith.addf %8, %11 : vector<4x32xf32>
    %c0_9 = arith.constant 0 : index
    %c0_10 = arith.constant 0 : index
    %13 = vector.load %arg10[%c0_9, %c0_10] : memref<4x32xf32, #tpu.memory_space<vmem>>, vector<4x32xf32>
    tpu.vector_store %arg10[%c0_9, %c0_10], %12 {strides = array<i32>} : memref<4x32xf32, #tpu.memory_space<vmem>>, vector<4x32xf32>,
    %c0_i32_11 = arith.constant 0 : i32
    %14 = arith.cmpi eq, %arg2, %c0_i32_11 : i32
    %15 = arith.extui %14 : i1 to i32
    %c0_i32_12 = arith.constant 0 : i32
    %16 = arith.cmpi ne, %15, %c0_i32_12 : i32
    scf.if %16 {
      %c0_13 = arith.constant 0 : index
      %c0_14 = arith.constant 0 : index
      %17 = vector.load %arg10[%c0_13, %c0_14] : memref<4x32xf32, #tpu.memory_space<vmem>>, vector<4x32xf32>
      %18 = arith.mulf %17, %17 : vector<4x32xf32>
      %cst_15 = arith.constant dense<0.000000e+00> : vector<4xf32>
      %19 = vector.multi_reduction <add>, %18, %cst_15 [1] : vector<4x32xf32> to vector<4xf32>
      %20 = vector.shape_cast %19 : vector<4xf32> to vector<4x1xf32>
      %cst_16 = arith.constant 9.99999996E-13 : f32
      %21 = vector.broadcast %cst_16 : f32 to vector<4x1xf32>
      %22 = arith.addf %20, %21 : vector<4x1xf32>
      %23 = math.rsqrt %22 : vector<4x1xf32>
      %c0_17 = arith.constant 0 : index
      %c0_18 = arith.constant 0 : index
      %c0_19 = arith.constant 0 : index
      %24 = vector.load %arg4[%c0_17, %c0_18, %c0_19] : memref<1x32x256xf32, #tpu.memory_space<vmem>>, vector<1x32x256xf32>
      %25 = vector.shape_cast %24 : vector<1x32x256xf32> to vector<32x256xf32>
      %cst_20 = arith.constant dense<0.000000e+00> : vector<4x256xf32>
      %26 = tpu.matmul %17, %25, %cst_20 {dimension_numbers = #tpu.dot_dimension_numbers<[1], [0], [0], [1], [0, 0, 1, 1], [], []>} : vector<4x32xf32>, vector<32x256xf32>, vector<4x256xf32> -> vector<4x256xf32>
      %27 = vector.broadcast %23 : vector<4x1xf32> to vector<4x256xf32>
      %28 = arith.mulf %26, %27 : vector<4x256xf32>
      %c0_21 = arith.constant 0 : index
      %c0_22 = arith.constant 0 : index
      %c0_23 = arith.constant 0 : index
      %29 = vector.load %arg5[%c0_21, %c0_22, %c0_23] : memref<1x1x256xf32, #tpu.memory_space<vmem>>, vector<1x1x256xf32>
      %30 = vector.shape_cast %29 : vector<1x1x256xf32> to vector<1x256xf32>
      %31 = vector.broadcast %30 : vector<1x256xf32> to vector<4x256xf32>
      %32 = arith.mulf %28, %31 : vector<4x256xf32>
      %33 = vector.extract_strided_slice %32 {offsets = [0, 0], sizes = [4, 128], strides = [1, 1]} : vector<4x256xf32> to vector<4x128xf32>
      %34 = vector.extract_strided_slice %32 {offsets = [0, 128], sizes = [4, 128], strides = [1, 1]} : vector<4x256xf32> to vector<4x128xf32>
      %35 = arith.maximumf %33, %34 : vector<4x128xf32>
      %cst_24 = arith.constant 0.000000e+00 : f32
      %36 = vector.broadcast %cst_24 : f32 to vector<4x128xf32>
      %cst_25 = arith.constant 0.000000e+00 : f32
      %37 = vector.broadcast %cst_25 : f32 to vector<4x128xf32>
      %38 = arith.subf %33, %35 : vector<4x128xf32>
      %cst_26 = arith.constant 1.000000e+01 : f32
      %39 = vector.broadcast %cst_26 : f32 to vector<4x128xf32>
      %40 = arith.mulf %39, %38 : vector<4x128xf32>
      %41 = math.exp %40 : vector<4x128xf32>
      %42 = arith.addf %37, %41 : vector<4x128xf32>
      %43 = arith.mulf %33, %41 : vector<4x128xf32>
      %44 = arith.addf %36, %43 : vector<4x128xf32>
      %45 = arith.subf %34, %35 : vector<4x128xf32>
      %cst_27 = arith.constant 1.000000e+01 : f32
      %46 = vector.broadcast %cst_27 : f32 to vector<4x128xf32>
      %47 = arith.mulf %46, %45 : vector<4x128xf32>
      %48 = math.exp %47 : vector<4x128xf32>
      %49 = arith.addf %42, %48 : vector<4x128xf32>
      %50 = arith.mulf %34, %48 : vector<4x128xf32>
      %51 = arith.addf %44, %50 : vector<4x128xf32>
      %52 = arith.divf %51, %49 : vector<4x128xf32>
      %53 = tpu.iota {dimensions = array<i32: 1>} : vector<4x128xi32>
      %c0_28 = arith.constant 0 : index
      %c0_29 = arith.constant 0 : index
      %c0_30 = arith.constant 0 : index
      %54 = vector.load %arg7[%c0_28, %c0_29, %c0_30] : memref<1x4x1xi32, #tpu.memory_space<vmem>>, vector<1x4x1xi32>
      %55 = vector.shape_cast %54 : vector<1x4x1xi32> to vector<4x1xi32>
      %56 = vector.broadcast %55 : vector<4x1xi32> to vector<4x128xi32>
      %57 = arith.cmpi eq, %53, %56 : vector<4x128xi32>
      %58 = arith.extui %57 : vector<4x128xi1> to vector<4x128xi32>
      %59 = arith.sitofp %58 : vector<4x128xi32> to vector<4x128xf32>
      %cst_31 = arith.constant 0.00999999977 : f32
      %60 = vector.broadcast %cst_31 : f32 to vector<4x128xf32>
      %61 = arith.mulf %60, %59 : vector<4x128xf32>
      %62 = arith.subf %52, %61 : vector<4x128xf32>
      %cst_32 = arith.constant 2.000000e+01 : f32
      %63 = vector.broadcast %cst_32 : f32 to vector<4x128xf32>
      %64 = arith.mulf %63, %62 : vector<4x128xf32>
      %c8_i32 = arith.constant 8 : i32
      %65 = vector.broadcast %c8_i32 : i32 to vector<4x128xi32>
      %66 = arith.cmpi slt, %53, %65 : vector<4x128xi32>
      %cst_33 = arith.constant -1.000000e+30 : f32
      %67 = vector.broadcast %cst_33 : f32 to vector<4x128xf32>
      %68 = arith.select %66, %64, %67 : vector<4x128xi1>, vector<4x128xf32>
      %cst_34 = arith.constant dense<0xFF800000> : vector<4xf32>
      %69 = vector.multi_reduction <maximumf>, %68, %cst_34 [1] : vector<4x128xf32> to vector<4xf32>
      %70 = vector.shape_cast %69 : vector<4xf32> to vector<4x1xf32>
      %71 = vector.broadcast %70 : vector<4x1xf32> to vector<4x128xf32>
      %72 = arith.subf %68, %71 : vector<4x128xf32>
      %73 = math.exp %72 : vector<4x128xf32>
      %cst_35 = arith.constant dense<0.000000e+00> : vector<4xf32>
      %74 = vector.multi_reduction <add>, %73, %cst_35 [1] : vector<4x128xf32> to vector<4xf32>
      %75 = vector.shape_cast %74 : vector<4xf32> to vector<4x1xf32>
      %76 = math.log %75 : vector<4x1xf32>
      %77 = arith.addf %76, %70 : vector<4x1xf32>
      %78 = arith.mulf %68, %59 : vector<4x128xf32>
      %cst_36 = arith.constant dense<0.000000e+00> : vector<4xf32>
      %79 = vector.multi_reduction <add>, %78, %cst_36 [1] : vector<4x128xf32> to vector<4xf32>
      %80 = vector.shape_cast %79 : vector<4xf32> to vector<4x1xf32>
      %81 = arith.subf %77, %80 : vector<4x1xf32>
      %c0_37 = arith.constant 0 : index
      %c0_38 = arith.constant 0 : index
      %c0_39 = arith.constant 0 : index
      %82 = vector.load %arg6[%c0_37, %c0_38, %c0_39] : memref<1x4x1xf32, #tpu.memory_space<vmem>>, vector<1x4x1xf32>
      %83 = vector.shape_cast %82 : vector<1x4x1xf32> to vector<4x1xf32>
      %c0_40 = arith.constant 0 : index
      %c0_41 = arith.constant 0 : index
      %84 = vector.load %arg8[%c0_40, %c0_41] : memref<4x128xf32, #tpu.memory_space<vmem>>, vector<4x128xf32>
      %85 = vector.broadcast %83 : vector<4x1xf32> to vector<4x128xf32>
      %86 = arith.mulf %85, %52 : vector<4x128xf32>
      %87 = arith.addf %84, %86 : vector<4x128xf32>
      %c0_42 = arith.constant 0 : index
      %c0_43 = arith.constant 0 : index
      %88 = vector.load %arg8[%c0_42, %c0_43] : memref<4x128xf32, #tpu.memory_space<vmem>>, vector<4x128xf32>
      tpu.vector_store %arg8[%c0_42, %c0_43], %87 {strides = array<i32>} : memref<4x128xf32, #tpu.memory_space<vmem>>, vector<4x128xf32>,
      %c0_44 = arith.constant 0 : index
      %c0_45 = arith.constant 0 : index
      %89 = vector.load %arg9[%c0_44, %c0_45] : memref<4x1xf32, #tpu.memory_space<vmem>>, vector<4x1xf32>
      %90 = arith.mulf %83, %81 : vector<4x1xf32>
      %91 = arith.addf %89, %90 : vector<4x1xf32>
      %c0_46 = arith.constant 0 : index
      %c0_47 = arith.constant 0 : index
      %92 = vector.load %arg9[%c0_46, %c0_47] : memref<4x1xf32, #tpu.memory_space<vmem>>, vector<4x1xf32>
      tpu.vector_store %arg9[%c0_46, %c0_47], %91 {strides = array<i32>} : memref<4x1xf32, #tpu.memory_space<vmem>>, vector<4x1xf32>,
    } else {
    }
    return
  }
  func.func @transform_0(%arg0: i32, %arg1: i32, %arg2: i32) -> (i32, i32, i32, i32) {
    %c0_i32 = arith.constant 0 : i32
    %c0_i32_0 = arith.constant 0 : i32
    return %arg1, %arg0, %c0_i32, %arg2 : i32, i32, i32, i32
  }
  func.func @transform_1(%arg0: i32, %arg1: i32, %arg2: i32) -> (i32, i32, i32) {
    %c0_i32 = arith.constant 0 : i32
    %c0_i32_0 = arith.constant 0 : i32
    %c0_i32_1 = arith.constant 0 : i32
    return %arg1, %c0_i32, %c0_i32_0 : i32, i32, i32
  }
  func.func @transform_2(%arg0: i32, %arg1: i32, %arg2: i32) -> (i32, i32, i32) {
    %c0_i32 = arith.constant 0 : i32
    %c0_i32_0 = arith.constant 0 : i32
    %c0_i32_1 = arith.constant 0 : i32
    return %arg1, %c0_i32, %c0_i32_0 : i32, i32, i32
  }
  func.func @transform_3(%arg0: i32, %arg1: i32, %arg2: i32) -> (i32, i32, i32) {
    %c0_i32 = arith.constant 0 : i32
    %c0_i32_0 = arith.constant 0 : i32
    return %arg1, %arg0, %c0_i32 : i32, i32, i32
  }
  func.func @transform_4(%arg0: i32, %arg1: i32, %arg2: i32) -> (i32, i32, i32) {
    %c0_i32 = arith.constant 0 : i32
    %c0_i32_0 = arith.constant 0 : i32
    return %arg1, %arg0, %c0_i32 : i32, i32, i32
  }
  func.func @transform_5(%arg0: i32, %arg1: i32, %arg2: i32) -> (i32, i32) {
    %c0_i32 = arith.constant 0 : i32
    %c0_i32_0 = arith.constant 0 : i32
    return %arg0, %c0_i32 : i32, i32
  }
  func.func @transform_6(%arg0: i32, %arg1: i32, %arg2: i32) -> (i32, i32) {
    %c0_i32 = arith.constant 0 : i32
    %c0_i32_0 = arith.constant 0 : i32
    return %arg0, %c0_i32 : i32, i32
  }
}

</mosaic_0001>

<llo_original>
// kernel: tpu_custom_call.1
$region0: #{tpu_custom_call.1}
  #allocation0 [shape = 'u32[]', space=smem, size = 0x4, offset = 0x4, fixed_abs, tag = 'smem constant byte address 0x4 - core index']
  #allocation1 [shape = 'u32[144,128]{1,0:T(1,128)}', space=vmem, size = 0x12000, scoped, tag = 'internal scratch']
  #allocation2 [shape = 'f32[4,32]{1,0:T(4,128)}', space=vmem, size = 0x800, scoped, tag = 'scratch operand']
  %s0 = inlined_call_operand.hbm [shape: f32[2,4,32,64], index: 0, kind: input, shape index: {}]
  %s1 = inlined_call_operand.hbm [shape: f32[2,32,256], index: 1, kind: input, shape index: {}]
  %s2 = inlined_call_operand.vmem [shape: f32[2,1,256], index: 2, kind: input, shape index: {}]
  %s3 = inlined_call_operand.vmem [shape: f32[2,4,1], index: 3, kind: input, shape index: {}]
  %s4 = inlined_call_operand.vmem [shape: s32[2,4,1], index: 4, kind: input, shape index: {}]
  %s5 = inlined_call_operand.hbm [shape: f32[4,128], index: 5, kind: output, shape index: {0}]
  %s6 = inlined_call_operand.vmem [shape: f32[4,1], index: 6, kind: output, shape index: {1}]
  %7 = xla_tuple %s5, %s6
  %s8 = sld [smem:[#allocation0]]
  $region81: #{tpu_custom_call.1} parent=0
    _
  %s10 = ssub.s32 1, %s8
  %s11 = scalar_select 0, %s10, %s8
  $region1: #{tpu_custom_call.1} parent=0
    #allocation3 [shape = 'u8[131072]{0}', space=vmem, size = 0x20000, scoped, tag = 'input window, operand 0']
    #allocation4 [shape = 's32[2]{0}', space=sflag, size = 0x8, scoped, tag = 'scoped memory for tpu_custom_call.1']
    #allocation5 [shape = 's32[2]{0}', space=sflag, size = 0x8, scoped, tag = 'scoped memory for tpu_custom_call.1']
    #allocation6 [shape = 'u8[65536]{0}', space=vmem, size = 0x10000, scoped, tag = 'input window, operand 1']
    #allocation7 [shape = 's32[2]{0}', space=sflag, size = 0x8, scoped, tag = 'scoped memory for tpu_custom_call.1']
    #allocation8 [shape = 'u8[2048]{0}', space=vmem, size = 0x800, scoped, tag = 'output window, operand 0, single buffered']
    %12 = vsyncpa [#allocation4], 0
    %s13 = scalar_lea.sflag [#allocation4], 1
    %14 = vsyncpa %s13, 0
    %15 = vsyncpa [#allocation7], 0
    %s16 = scalar_lea.sflag [#allocation7], 1
    %17 = vsyncpa %s16, 0
    %18 = vsyncpa [#allocation5], 0
    loop: start=0, step=1, limit=4
    $region2: #{tpu_custom_call.1} parent=1 // loop_pre_header
      _
    $region3: #{tpu_custom_call.1} parent=1 // loop_header
      %s20 = sphi 0, %s24
      %p21 = scmp.ge.s32.totalorder %s20, 4
      %s27 = sphi 0, %s46
      %s28 = sphi 0, %s42
      %s29 = sphi 0, %s38
      %s30 = sphi 0, %s27
      %s31 = sphi 0, %s28
      %s32 = sphi 0, %s29
      %s33 = sphi 0, %s30
      %s34 = sphi 0, %s31
      %s35 = sphi 0, %s32
      %s53 = sphi 0, %s55
      %s56 = sphi 0, %s53
      %s57 = sphi 0, %s56
      %s73 = sphi 0, %s57
      %s79 = sphi 0, %s81
      %s82 = sphi 0, %s79
      %s83 = sphi 0, %s82
      %s99 = sphi 0, %s83
      %s105 = sphi 0, %s107
      %s108 = sphi 0, %s105
      %s109 = sphi 0, %s108
      %s125 = sphi 0, %s109
      %s133 = sphi 0, %s135
      %s136 = sphi 0, %s133
      %s137 = sphi 0, %s136
      %s153 = sphi 0, %s137
      %s161 = sphi 0, %s163
      %s164 = sphi 0, %s161
      %s165 = sphi 0, %s164
      %s181 = sphi 0, %s165
      %s187 = sphi 0, %s189
      %s190 = sphi 0, %s187
      %s191 = sphi 0, %s190
      %s207 = sphi 0, %s191
      %s213 = sphi 0, %s215
      %s216 = sphi 0, %s213
      %s217 = sphi 0, %s216
      %s233 = sphi 0, %s217
    $region4: #{tpu_custom_call.1} parent=1 // loop_header_branch
      %23 = sbr.rel (%p21) target = $region8
    $region5: #{tpu_custom_call.1} parent=1 // loop_body
      %s25 = ssub.s32 %s20, 1
      %s26 = ssub.s32 %s20, 2
      %s36 = sadd.s32 1, %s29
      %p37 = scmp.ge.s32.totalorder %s36, 1
      %s38 = scalar_select %p37, 0, %s36
      %s39 = sadd.s32 1, %s28
      %s40 = scalar_select %p37, %s39, %s28
      %p41 = scmp.ge.s32.totalorder %s40, 2
      %s42 = scalar_select %p41, 0, %s40
      %s43 = sadd.s32 1, %s27
      %s44 = scalar_select %p41, %s43, %s27
      %p45 = scmp.ge.s32.totalorder %s44, 1
      %s46 = scalar_select %p45, 0, %s44
      %s47 = ssub.s32 %s28, %s42
      %s48 = ssub.s32 %s27, %s46
      %s49 = sor.u32 %s47, %s48
      %s50 = ssub.s32 %s29, %s38
      %s51 = sor.u32 %s49, %s50
      %p52 = scmp.eq.s32.totalorder %s51, 0
      %s54 = sadd.s32 %s53, 1
      %s55 = scalar_select %p52, %s53, %s54
      %p58 = pneg %p52
      %p59 = scmp.eq.s32.totalorder %s20, 1
      %p60 = por %p58, %p59
      %p61 = scmp.ne.s32.totalorder %s53, %s56
      %p62 = scmp.eq.s32.totalorder %s20, 0
      %p63 = por %p61, %p62
      %p64 = scmp.ne.s32.totalorder %s53, %s56
      %p65 = scmp.eq.s32.totalorder %s25, 1
      %p66 = por %p64, %p65
      %p67 = scmp.ne.s32.totalorder %s56, %s57
      %p68 = scmp.eq.s32.totalorder %s25, 0
      %p69 = por %p67, %p68
      %p70 = scmp.ne.s32.totalorder %s56, %s57
      %p71 = scmp.eq.s32.totalorder %s26, 1
      %p72 = por %p70, %p71
      %p74 = scmp.ne.s32.totalorder %s57, %s73
      %p75 = scmp.eq.s32.totalorder %s26, 0
      %p76 = por %p74, %p75
      %s77 = ssub.s32 %s28, %s42
      %p78 = scmp.eq.s32.totalorder %s77, 0
      %s80 = sadd.s32 %s79, 1
      %s81 = scalar_select %p78, %s79, %s80
      %p84 = pneg %p78
      %p85 = scmp.eq.s32.totalorder %s20, 1
      %p86 = por %p84, %p85
      %p87 = scmp.ne.s32.totalorder %s79, %s82
      %p88 = scmp.eq.s32.totalorder %s20, 0
      %p89 = por %p87, %p88
      %p90 = scmp.ne.s32.totalorder %s79, %s82
      %p91 = scmp.eq.s32.totalorder %s25, 1
      %p92 = por %p90, %p91
      %p93 = scmp.ne.s32.totalorder %s82, %s83
      %p94 = scmp.eq.s32.totalorder %s25, 0
      %p95 = por %p93, %p94
      %p96 = scmp.ne.s32.totalorder %s82, %s83
      %p97 = scmp.eq.s32.totalorder %s26, 1
      %p98 = por %p96, %p97
      %p100 = scmp.ne.s32.totalorder %s83, %s99
      %p101 = scmp.eq.s32.totalorder %s26, 0
      %p102 = por %p100, %p101
      %s103 = ssub.s32 %s28, %s42
      %p104 = scmp.eq.s32.totalorder %s103, 0
      %s106 = sadd.s32 %s105, 1
      %s107 = scalar_select %p104, %s105, %s106
      %p110 = pneg %p104
      %p111 = scmp.eq.s32.totalorder %s20, 1
      %p112 = por %p110, %p111
      %p113 = scmp.ne.s32.totalorder %s105, %s108
      %p114 = scmp.eq.s32.totalorder %s20, 0
      %p115 = por %p113, %p114
      %p116 = scmp.ne.s32.totalorder %s105, %s108
      %p117 = scmp.eq.s32.totalorder %s25, 1
      %p118 = por %p116, %p117
      %p119 = scmp.ne.s32.totalorder %s108, %s109
      %p120 = scmp.eq.s32.totalorder %s25, 0
      %p121 = por %p119, %p120
      %p122 = scmp.ne.s32.totalorder %s108, %s109
      %p123 = scmp.eq.s32.totalorder %s26, 1
      %p124 = por %p122, %p123
      %p126 = scmp.ne.s32.totalorder %s109, %s125
      %p127 = scmp.eq.s32.totalorder %s26, 0
      %p128 = por %p126, %p127
      %s129 = ssub.s32 %s28, %s42
      %s130 = ssub.s32 %s27, %s46
      %s131 = sor.u32 %s129, %s130
      %p132 = scmp.eq.s32.totalorder %s131, 0
      %s134 = sadd.s32 %s133, 1
      %s135 = scalar_select %p132, %s133, %s134
      %p138 = pneg %p132
      %p139 = scmp.eq.s32.totalorder %s20, 1
      %p140 = por %p138, %p139
      %p141 = scmp.ne.s32.totalorder %s133, %s136
      %p142 = scmp.eq.s32.totalorder %s20, 0
      %p143 = por %p141, %p142
      %p144 = scmp.ne.s32.totalorder %s133, %s136
      %p145 = scmp.eq.s32.totalorder %s25, 1
      %p146 = por %p144, %p145
      %p147 = scmp.ne.s32.totalorder %s136, %s137
      %p148 = scmp.eq.s32.totalorder %s25, 0
      %p149 = por %p147, %p148
      %p150 = scmp.ne.s32.totalorder %s136, %s137
      %p151 = scmp.eq.s32.totalorder %s26, 1
      %p152 = por %p150, %p151
      %p154 = scmp.ne.s32.totalorder %s137, %s153
      %p155 = scmp.eq.s32.totalorder %s26, 0
      %p156 = por %p154, %p155
      %s157 = ssub.s32 %s28, %s42
      %s158 = ssub.s32 %s27, %s46
      %s159 = sor.u32 %s157, %s158
      %p160 = scmp.eq.s32.totalorder %s159, 0
      %s162 = sadd.s32 %s161, 1
      %s163 = scalar_select %p160, %s161, %s162
      %p166 = pneg %p160
      %p167 = scmp.eq.s32.totalorder %s20, 1
      %p168 = por %p166, %p167
      %p169 = scmp.ne.s32.totalorder %s161, %s164
      %p170 = scmp.eq.s32.totalorder %s20, 0
      %p171 = por %p169, %p170
      %p172 = scmp.ne.s32.totalorder %s161, %s164
      %p173 = scmp.eq.s32.totalorder %s25, 1
      %p174 = por %p172, %p173
      %p175 = scmp.ne.s32.totalorder %s164, %s165
      %p176 = scmp.eq.s32.totalorder %s25, 0
      %p177 = por %p175, %p176
      %p178 = scmp.ne.s32.totalorder %s164, %s165
      %p179 = scmp.eq.s32.totalorder %s26, 1
      %p180 = por %p178, %p179
      %p182 = scmp.ne.s32.totalorder %s165, %s181
      %p183 = scmp.eq.s32.totalorder %s26, 0
      %p184 = por %p182, %p183
      %s185 = ssub.s32 %s27, %s46
      %p186 = scmp.eq.s32.totalorder %s185, 0
      %s188 = sadd.s32 %s187, 1
      %s189 = scalar_select %p186, %s187, %s188
      %p192 = pneg %p186
      %p193 = scmp.eq.s32.totalorder %s20, 1
      %p194 = por %p192, %p193
      %p195 = scmp.ne.s32.totalorder %s187, %s190
      %p196 = scmp.eq.s32.totalorder %s20, 0
      %p197 = por %p195, %p196
      %p198 = scmp.ne.s32.totalorder %s187, %s190
      %p199 = scmp.eq.s32.totalorder %s25, 1
      %p200 = por %p198, %p199
      %p201 = scmp.ne.s32.totalorder %s190, %s191
      %p202 = scmp.eq.s32.totalorder %s25, 0
      %p203 = por %p201, %p202
      %p204 = scmp.ne.s32.totalorder %s190, %s191
      %p205 = scmp.eq.s32.totalorder %s26, 1
      %p206 = por %p204, %p205
      %p208 = scmp.ne.s32.totalorder %s191, %s207
      %p209 = scmp.eq.s32.totalorder %s26, 0
      %p210 = por %p208, %p209
      %s211 = ssub.s32 %s27, %s46
      %p212 = scmp.eq.s32.totalorder %s211, 0
      %s214 = sadd.s32 %s213, 1
      %s215 = scalar_select %p212, %s213, %s214
      %p218 = pneg %p212
      %p219 = scmp.eq.s32.totalorder %s20, 1
      %p220 = por %p218, %p219
      %p221 = scmp.ne.s32.totalorder %s213, %s216
      %p222 = scmp.eq.s32.totalorder %s20, 0
      %p223 = por %p221, %p222
      %p224 = scmp.ne.s32.totalorder %s213, %s216
      %p225 = scmp.eq.s32.totalorder %s25, 1
      %p226 = por %p224, %p225
      %p227 = scmp.ne.s32.totalorder %s216, %s217
      %p228 = scmp.eq.s32.totalorder %s25, 0
      %p229 = por %p227, %p228
      %p230 = scmp.ne.s32.totalorder %s216, %s217
      %p231 = scmp.eq.s32.totalorder %s26, 1
      %p232 = por %p230, %p231
      %p234 = scmp.ne.s32.totalorder %s217, %s233
      %p235 = scmp.eq.s32.totalorder %s26, 0
      %p236 = por %p234, %p235
      %p237 = scmp.le.s32.totalorder 1, %s20
      %p238 = scmp.lt.s32.totalorder %s20, 3
      %p239 = pnand %p237, %p238
      %p240 = pneg %p239
      // Predicated region
      $region9: #{tpu_custom_call.1} parent=5 // pred_check
        _
      $region10: #{tpu_custom_call.1} parent=5 // pred_check_branch
        %242 = sbr.rel (%p239) target = $region12
      $region11: #{tpu_custom_call.1} parent=5 // pred_region
        %s243 = ssub.s32 %s20, 1
      $region12: #{tpu_custom_call.1} parent=5 // pred_fallthru
        _
      %p244 = scmp.lt.s32.totalorder %s20, 2
      // Predicated region
      $region13: #{tpu_custom_call.1} parent=5 // pred_check
        %p245 = pneg %p244
      $region14: #{tpu_custom_call.1} parent=5 // pred_check_branch
        %247 = sbr.rel (%p245) target = $region16
      $region15: #{tpu_custom_call.1} parent=5 // pred_region
        // Predicated region
        $region17: #{tpu_custom_call.1} parent=15 // pred_check
          %p248 = pneg %p63
        $region18: #{tpu_custom_call.1} parent=15 // pred_check_branch
          %250 = sbr.rel (%p248) target = $region20
        $region19: #{tpu_custom_call.1} parent=15 // pred_region
          %s251 = sand.u32 %s53, 1
          %s252 = scalar_lea.sflag [#allocation4], %s251
          %s253 = sand.u32 %s53, 1
          %s254 = smul.addr %s253, 128
          %s255 = scalar_lea.vmem [#allocation3], %s254
          %s256 = smul.u32 4, %s27
          %s258 = ssub.s32 2048, 2048
          %259 = vsyncadd %s252, %s258
          %s260 = smul.addr %s256, 4
          %s261 = sadd.s32 %s29, %s260
          %s262 = smul.addr %s28, 16
          %s263 = sadd.s32 %s261, %s262
          %s264 = smul.addr %s263, 128
          %s265 = scalar_lea.hbm %s0, %s264
          %s266 = sshll.u32 %s255, 4
          %s267 = int_to_ptr.vmem [resolvable:$true] %s266
          %272 = dma.hbm_to_vmem [thread:$0]  %s265, 2048, %s267, %s252, 128, 128, 8
        $region20: #{tpu_custom_call.1} parent=15 // pred_fallthru
          _
        // Predicated region
        $region21: #{tpu_custom_call.1} parent=15 // pred_check
          %p273 = pneg %p89
        $region22: #{tpu_custom_call.1} parent=15 // pred_check_branch
          %275 = sbr.rel (%p273) target = $region24
        $region23: #{tpu_custom_call.1} parent=15 // pred_region
          %s276 = sand.u32 %s79, 1
          %s277 = scalar_lea.sflag [#allocation7], %s276
          %s278 = sand.u32 %s79, 1
          %s279 = smul.addr %s278, 64
          %s280 = scalar_lea.vmem [#allocation6], %s279
          %s282 = ssub.s32 1024, 1024
          %283 = vsyncadd %s277, %s282
          %s284 = smul.addr %s28, 8
          %s285 = smul.addr %s284, 128
          %s286 = scalar_lea.hbm %s1, %s285
          %s287 = sshll.u32 %s280, 4
          %s288 = int_to_ptr.vmem [resolvable:$true] %s287
          %293 = dma.hbm_to_vmem [thread:$0]  %s286, 1024, %s288, %s277, 256, 256, 16
        $region24: #{tpu_custom_call.1} parent=15 // pred_fallthru
          _
        // Predicated region
        $region25: #{tpu_custom_call.1} parent=15 // pred_check
          %p294 = pneg %p115
        $region26: #{tpu_custom_call.1} parent=15 // pred_check_branch
          %296 = sbr.rel (%p294) target = $region28
        $region27: #{tpu_custom_call.1} parent=15 // pred_region
          %p297 = scmp.lt.s32.totalorder %s28, 1
          %s298 = scalar_select %p297, %s28, 1
          %s299 = smul.addr %s298, 2
          %s300 = scalar_lea.vmem %s2, %s299
        $region28: #{tpu_custom_call.1} parent=15 // pred_fallthru
          _
        // Predicated region
        $region29: #{tpu_custom_call.1} parent=15 // pred_check
          %p301 = pneg %p143
        $region30: #{tpu_custom_call.1} parent=15 // pred_check_branch
          %303 = sbr.rel (%p301) target = $region32
        $region31: #{tpu_custom_call.1} parent=15 // pred_region
          %p304 = scmp.lt.s32.totalorder %s28, 1
          %s305 = scalar_select %p304, %s28, 1
          %p306 = scmp.lt.s32.totalorder %s27, 0
          %s307 = scalar_select %p306, %s27, 0
          %s308 = sadd.s32 %s307, %s305
          %s309 = smul.addr %s308, 4
          %s310 = scalar_lea.vmem %s3, %s309
        $region32: #{tpu_custom_call.1} parent=15 // pred_fallthru
          _
        // Predicated region
        $region33: #{tpu_custom_call.1} parent=15 // pred_check
          %p311 = pneg %p171
        $region34: #{tpu_custom_call.1} parent=15 // pred_check_branch
          %313 = sbr.rel (%p311) target = $region36
        $region35: #{tpu_custom_call.1} parent=15 // pred_region
          %p314 = scmp.lt.s32.totalorder %s28, 1
          %s315 = scalar_select %p314, %s28, 1
          %p316 = scmp.lt.s32.totalorder %s27, 0
          %s317 = scalar_select %p316, %s27, 0
          %s318 = sadd.s32 %s317, %s315
          %s319 = smul.addr %s318, 4
          %s320 = scalar_lea.vmem %s4, %s319
        $region36: #{tpu_custom_call.1} parent=15 // pred_fallthru
          _
      $region16: #{tpu_custom_call.1} parent=5 // pred_fallthru
        _
      %p321 = scmp.le.s32.totalorder 1, %s20
      %p322 = scmp.lt.s32.totalorder %s20, 3
      %p323 = pnand %p321, %p322
      %p324 = pneg %p323
      // Predicated region
      $region37: #{tpu_custom_call.1} parent=5 // pred_check
        _
      $region38: #{tpu_custom_call.1} parent=5 // pred_check_branch
        %326 = sbr.rel (%p323) target = $region40
      $region39: #{tpu_custom_call.1} parent=5 // pred_region
        %s327 = ssub.s32 %s20, 1
        %s328 = sand.u32 %s56, 1
        %s329 = scalar_lea.sflag [#allocation4], %s328
        %s330 = sand.u32 %s56, 1
        %s331 = smul.addr %s330, 128
        %s332 = scalar_lea.vmem [#allocation3], %s331
        // Predicated region
        $region41: #{tpu_custom_call.1} parent=39 // pred_check
          %p333 = pneg %p69
        $region42: #{tpu_custom_call.1} parent=39 // pred_check_branch
          %335 = sbr.rel (%p333) target = $region44
        $region43: #{tpu_custom_call.1} parent=39 // pred_region
          %336 = dma.done %s329, 2048
        $region44: #{tpu_custom_call.1} parent=39 // pred_fallthru
          _
        %s337 = sand.u32 %s82, 1
        %s338 = scalar_lea.sflag [#allocation7], %s337
        %s339 = sand.u32 %s82, 1
        %s340 = smul.addr %s339, 64
        %s341 = scalar_lea.vmem [#allocation6], %s340
        // Predicated region
        $region45: #{tpu_custom_call.1} parent=39 // pred_check
          %p342 = pneg %p95
        $region46: #{tpu_custom_call.1} parent=39 // pred_check_branch
          %344 = sbr.rel (%p342) target = $region48
        $region47: #{tpu_custom_call.1} parent=39 // pred_region
          %345 = dma.done %s338, 1024
        $region48: #{tpu_custom_call.1} parent=39 // pred_fallthru
          _
        %s346 = sand.u32 %s56, 1
        %s347 = scalar_lea.sflag [#allocation4], %s346
        %s348 = sand.u32 %s56, 1
        %s349 = smul.addr %s348, 128
        %s350 = scalar_lea.vmem [#allocation3], %s349
        %p351 = pneg %p69
        %p352 = pneg %p66
        %s353 = sand.u32 %s82, 1
        %s354 = scalar_lea.sflag [#allocation7], %s353
        %s355 = sand.u32 %s82, 1
        %s356 = smul.addr %s355, 64
        %s357 = scalar_lea.vmem [#allocation6], %s356
        %p358 = pneg %p95
        %p359 = pneg %p92
        %p360 = scmp.lt.s32.totalorder %s31, 1
        %s361 = scalar_select %p360, %s31, 1
        %s362 = smul.addr %s361, 2
        %s363 = scalar_lea.vmem %s2, %s362
        %p364 = pneg %p121
        %p365 = pneg %p118
        %p366 = scmp.lt.s32.totalorder %s31, 1
        %s367 = scalar_select %p366, %s31, 1
        %p368 = scmp.lt.s32.totalorder %s30, 0
        %s369 = scalar_select %p368, %s30, 0
        %s370 = sadd.s32 %s369, %s367
        %s371 = smul.addr %s370, 4
        %s372 = scalar_lea.vmem %s3, %s371
        %p373 = pneg %p149
        %p374 = pneg %p146
        %p375 = scmp.lt.s32.totalorder %s31, 1
        %s376 = scalar_select %p375, %s31, 1
        %p377 = scmp.lt.s32.totalorder %s30, 0
        %s378 = scalar_select %p377, %s30, 0
        %s379 = sadd.s32 %s378, %s376
        %s380 = smul.addr %s379, 4
        %s381 = scalar_lea.vmem %s4, %s380
        %p382 = pneg %p177
        %p383 = pneg %p174
        %p384 = pneg %p203
        %p385 = pneg %p200
        %p386 = pneg %p229
        %p387 = pneg %p226
        %p388 = scmp.lt.s32.totalorder %s30, 0
        %s389 = scalar_select %p388, %s30, 0
        %s390 = smul.addr %s389, 4
        %s391 = scalar_lea.vmem %s6, %s390
        %s392 = smul.u32 4, %s30
        %p393 = scmp.lt.s32.totalorder %s31, 1
        %s394 = scalar_select %p393, %s31, 1
        %s395 = smul.addr %s394, 2
        %s396 = scalar_lea.vmem %s2, %s395
        %p397 = scmp.lt.s32.totalorder %s31, 1
        %s398 = scalar_select %p397, %s31, 1
        %p399 = scmp.lt.s32.totalorder %s30, 0
        %s400 = scalar_select %p399, %s30, 0
        %s401 = sadd.s32 %s400, %s398
        %s402 = smul.addr %s401, 4
        %s403 = scalar_lea.vmem %s3, %s402
        %p404 = scmp.lt.s32.totalorder %s31, 1
        %s405 = scalar_select %p404, %s31, 1
        %p406 = scmp.lt.s32.totalorder %s30, 0
        %s407 = scalar_select %p406, %s30, 0
        %s408 = sadd.s32 %s407, %s405
        %s409 = smul.addr %s408, 4
        %s410 = scalar_lea.vmem %s4, %s409
        %p411 = scmp.lt.s32.totalorder %s30, 0
        %s412 = scalar_select %p411, %s30, 0
        %s413 = smul.addr %s412, 4
        %s414 = scalar_lea.vmem %s6, %s413
        %p415 = scmp.eq.s32.totalorder %s31, 0
        %p416 = scmp.eq.s32.totalorder %s32, 0
        %p417 = pnand %p415, %p416
        %p418 = pneg %p417
        // Predicated region
        $region49: #{tpu_custom_call.1} parent=39 // pred_check
          _
        $region50: #{tpu_custom_call.1} parent=39 // pred_check_branch
          %420 = sbr.rel (%p417) target = $region52
        $region51: #{tpu_custom_call.1} parent=39 // pred_region
          %421 = vst [vmem:[#allocation8] sm:$0xf] 0.0
          %vm422 = vcmask 3072
          %423 = vst.msk [vmem:[%s414] sm:$0xf] %vm422, 0.0
        $region52: #{tpu_custom_call.1} parent=39 // pred_fallthru
          _
        // Predicated region
        $region53: #{tpu_custom_call.1} parent=39 // pred_check
          %p424 = pneg %p416
        $region54: #{tpu_custom_call.1} parent=39 // pred_check_branch
          %426 = sbr.rel (%p424) target = $region56
        $region55: #{tpu_custom_call.1} parent=39 // pred_region
          %vm427 = vcmask 257024
          %428 = vst.msk [vmem:[#allocation2] sm:$0xf] %vm427, 0.0
        $region56: #{tpu_custom_call.1} parent=39 // pred_fallthru
          _
        %v429 = vld [vmem:[#allocation2] sm:$0xf]
        %v430 = vld [vmem:[%s332] sm:$0xff]
        %v431 = vld [vmem:[%s332 + $0x8] sm:$0xff]
        %v432 = vld [vmem:[%s332 + $0x10] sm:$0xff]
        %v433 = vld [vmem:[%s332 + $0x18] sm:$0xff]
        %v434 = vld [vmem:[%s332 + $0x20] sm:$0xff]
        %v435 = vld [vmem:[%s332 + $0x28] sm:$0xff]
        %v436 = vld [vmem:[%s332 + $0x30] sm:$0xff]
        %v437 = vld [vmem:[%s332 + $0x38] sm:$0xff]
        %v438 = vld [vmem:[%s332 + $0x40] sm:$0xff]
        %v439 = vld [vmem:[%s332 + $0x48] sm:$0xff]
        %v440 = vld [vmem:[%s332 + $0x50] sm:$0xff]
        %v441 = vld [vmem:[%s332 + $0x58] sm:$0xff]
        %v442 = vld [vmem:[%s332 + $0x60] sm:$0xff]
        %v443 = vld [vmem:[%s332 + $0x68] sm:$0xff]
        %v444 = vld [vmem:[%s332 + $0x70] sm:$0xff]
        %v445 = vld [vmem:[%s332 + $0x78] sm:$0xff]
        %vm446 = vcmask 523264
        %v447 = vsel %vm446, %v430, 0.0
        %448 = vadd.xlane.f32.xlu0 %v447
        %v449 = vpop.xlane.xlu0 %448
        %v450 = vsel %vm446, %v431, 0.0
        %451 = vadd.xlane.f32.xlu0 %v450
        %v452 = vpop.xlane.xlu0 %451
        %v453 = vsel %vm446, %v432, 0.0
        %454 = vadd.xlane.f32.xlu0 %v453
        %v455 = vpop.xlane.xlu0 %454
        %v456 = vsel %vm446, %v433, 0.0
        %457 = vadd.xlane.f32.xlu0 %v456
        %v458 = vpop.xlane.xlu0 %457
        %v459 = vsel %vm446, %v434, 0.0
        %460 = vadd.xlane.f32.xlu0 %v459
        %v461 = vpop.xlane.xlu0 %460
        %v462 = vsel %vm446, %v435, 0.0
        %463 = vadd.xlane.f32.xlu0 %v462
        %v464 = vpop.xlane.xlu0 %463
        %v465 = vsel %vm446, %v436, 0.0
        %466 = vadd.xlane.f32.xlu0 %v465
        %v467 = vpop.xlane.xlu0 %466
        %v468 = vsel %vm446, %v437, 0.0
        %469 = vadd.xlane.f32.xlu0 %v468
        %v470 = vpop.xlane.xlu0 %469
        %v471 = vsel %vm446, %v438, 0.0
        %472 = vadd.xlane.f32.xlu0 %v471
        %v473 = vpop.xlane.xlu0 %472
        %v474 = vsel %vm446, %v439, 0.0
        %475 = vadd.xlane.f32.xlu0 %v474
        %v476 = vpop.xlane.xlu0 %475
        %v477 = vsel %vm446, %v440, 0.0
        %478 = vadd.xlane.f32.xlu0 %v477
        %v479 = vpop.xlane.xlu0 %478
        %v480 = vsel %vm446, %v441, 0.0
        %481 = vadd.xlane.f32.xlu0 %v480
        %v482 = vpop.xlane.xlu0 %481
        %v483 = vsel %vm446, %v442, 0.0
        %484 = vadd.xlane.f32.xlu0 %v483
        %v485 = vpop.xlane.xlu0 %484
        %v486 = vsel %vm446, %v443, 0.0
        %487 = vadd.xlane.f32.xlu0 %v486
        %v488 = vpop.xlane.xlu0 %487
        %v489 = vsel %vm446, %v444, 0.0
        %490 = vadd.xlane.f32.xlu0 %v489
        %v491 = vpop.xlane.xlu0 %490
        %v492 = vsel %vm446, %v445, 0.0
        %493 = vadd.xlane.f32.xlu0 %v492
        %v494 = vpop.xlane.xlu0 %493
        %v511 = vlaneseq
        %v512 = vand.u32 %v511, 127
        %v513 = vlaneseq
        %v514 = vshrl.u32 %v513, 7
        %v515 = vsub.s32 %v512, %v514
        %v516 = vrot.slane %v449, %v515
        %v517 = vadd.s32 %v512, 4294967288
        %v518 = vlaneseq
        %v519 = vshrl.u32 %v518, 7
        %v520 = vsub.s32 %v517, %v519
        %v521 = vrot.slane %v452, %v520
        %vm522 = vcmask 130112
        %v523 = vsel %vm522, %v521, %v516
        %v524 = vadd.s32 %v512, 4294967280
        %v525 = vlaneseq
        %v526 = vshrl.u32 %v525, 7
        %v527 = vsub.s32 %v524, %v526
        %v528 = vrot.slane %v455, %v527
        %vm529 = vcmask 195712
        %v530 = vsel %vm529, %v528, %v523
        %v531 = vadd.s32 %v512, 4294967272
        %v532 = vlaneseq
        %v533 = vshrl.u32 %v532, 7
        %v534 = vsub.s32 %v531, %v533
        %v535 = vrot.slane %v458, %v534
        %vm536 = vcmask 261312
        %v537 = vsel %vm536, %v535, %v530
        %v538 = vlaneseq
        %v539 = vshrl.u32 %v538, 7
        %v540 = vsub.s32 %v512, %v539
        %v541 = vrot.slane %v461, %v540
        %v542 = vlaneseq
        %v543 = vshrl.u32 %v542, 7
        %v544 = vsub.s32 %v517, %v543
        %v545 = vrot.slane %v464, %v544
        %v546 = vsel %vm522, %v545, %v541
        %v547 = vlaneseq
        %v548 = vshrl.u32 %v547, 7
        %v549 = vsub.s32 %v524, %v548
        %v550 = vrot.slane %v467, %v549
        %v551 = vsel %vm529, %v550, %v546
        %v552 = vlaneseq
        %v553 = vshrl.u32 %v552, 7
        %v554 = vsub.s32 %v531, %v553
        %v555 = vrot.slane %v470, %v554
        %v556 = vsel %vm536, %v555, %v551
        %v557 = vlaneseq
        %v558 = vshrl.u32 %v557, 7
        %v559 = vsub.s32 %v512, %v558
        %v560 = vrot.slane %v473, %v559
        %v561 = vlaneseq
        %v562 = vshrl.u32 %v561, 7
        %v563 = vsub.s32 %v517, %v562
        %v564 = vrot.slane %v476, %v563
        %v565 = vsel %vm522, %v564, %v560
        %v566 = vlaneseq
        %v567 = vshrl.u32 %v566, 7
        %v568 = vsub.s32 %v524, %v567
        %v569 = vrot.slane %v479, %v568
        %v570 = vsel %vm529, %v569, %v565
        %v571 = vlaneseq
        %v572 = vshrl.u32 %v571, 7
        %v573 = vsub.s32 %v531, %v572
        %v574 = vrot.slane %v482, %v573
        %v575 = vsel %vm536, %v574, %v570
        %v576 = vlaneseq
        %v577 = vshrl.u32 %v576, 7
        %v578 = vsub.s32 %v512, %v577
        %v579 = vrot.slane %v485, %v578
        %v580 = vlaneseq
        %v581 = vshrl.u32 %v580, 7
        %v582 = vsub.s32 %v517, %v581
        %v583 = vrot.slane %v488, %v582
        %v584 = vsel %vm522, %v583, %v579
        %v585 = vlaneseq
        %v586 = vshrl.u32 %v585, 7
        %v587 = vsub.s32 %v524, %v586
        %v588 = vrot.slane %v491, %v587
        %v589 = vsel %vm529, %v588, %v584
        %v590 = vlaneseq
        %v591 = vshrl.u32 %v590, 7
        %v592 = vsub.s32 %v531, %v591
        %v593 = vrot.slane %v494, %v592
        %v594 = vsel %vm536, %v593, %v589
        %vm595 = vcmask 1041409
        %v596 = vsel %vm595, %v556, %v537
        %vm597 = vcmask 1042434
        %v598 = vsel %vm597, %v575, %v596
        %vm599 = vcmask 1043459
        %v600 = vsel %vm599, %v594, %v598
        %v602 = vadd.f32 %v429, %v600
        %vm603 = vcmask 257024
        %604 = vst.msk [vmem:[#allocation2] sm:$0xf] %vm603, %v602
        // Predicated region
        $region57: #{tpu_custom_call.1} parent=39 // pred_check
          %p605 = pneg %p416
        $region58: #{tpu_custom_call.1} parent=39 // pred_check_branch
          %607 = sbr.rel (%p605) target = $region60
        $region59: #{tpu_custom_call.1} parent=39 // pred_region
          %v608 = vld [vmem:[#allocation2] sm:$0xf]
          %v609 = vmul.f32 %v608, %v608
          %v610 = vsel %vm603, %v609, 0.0
          %611 = vadd.xlane.f32.xlu0 %v610
          %v612 = vpop.xlane.xlu0 %611
          %v613 = vadd.f32 %v612, 1e-12
          %v614 = vrsqrt.pop %v613
          %v615 = vld [vmem:[%s341] sm:$0xff]
          %v616 = vld [vmem:[%s341 + $0x8] sm:$0xff]
          %v617 = vld [vmem:[%s341 + $0x10] sm:$0xff]
          %v618 = vld [vmem:[%s341 + $0x18] sm:$0xff]
          %v619 = vld [vmem:[%s341 + $0x20] sm:$0xff]
          %v620 = vld [vmem:[%s341 + $0x28] sm:$0xff]
          %v621 = vld [vmem:[%s341 + $0x30] sm:$0xff]
          %v622 = vld [vmem:[%s341 + $0x38] sm:$0xff]
          %vm623 = vcmask 261120
          %v625 = vsel %vm623, %v608, 0
          %627 = vmatprep.subr.mxu0 %v616
          %628 = vmatpush1.msra.mxu0 %v615
          %629 = vmatprep.subr.mxu0 %v618
          %630 = vmatpush1.msra.mxu0 %v617
          %631 = vmatprep.subr.mxu0 %v620
          %632 = vmatpush1.msra.mxu0 %v619
          %633 = vmatprep.subr.mxu0 %v622
          %634 = vmatpush1.msra.mxu0 %v621
          %635 = vmatprep.subr.mxu0 0.0
          %636 = vmatpush1.msra.mxu0 0.0
          %637 = vmatprep.subr.mxu0 0.0
          %638 = vmatpush1.msra.mxu0 0.0
          %639 = vmatprep.subr.mxu0 0.0
          %640 = vmatpush1.msra.mxu0 0.0
          %641 = vmatprep.subr.mxu0 0.0
          %642 = vmatpush1.msra.mxu0 0.0
          %643 = vmatprep.subr.mxu0 0.0
          %644 = vmatpush1.msra.mxu0 0.0
          %645 = vmatprep.subr.mxu0 0.0
          %646 = vmatpush1.msra.mxu0 0.0
          %647 = vmatprep.subr.mxu0 0.0
          %648 = vmatpush1.msra.mxu0 0.0
          %649 = vmatprep.subr.mxu0 0.0
          %650 = vmatpush1.msra.mxu0 0.0
          %651 = vmatprep.subr.mxu0 0.0
          %652 = vmatpush1.msra.mxu0 0.0
          %653 = vmatprep.subr.mxu0 0.0
          %654 = vmatpush1.msra.mxu0 0.0
          %655 = vmatprep.subr.mxu0 0.0
          %656 = vmatpush1.msra.mxu0 0.0
          %657 = vmatprep.subr.mxu0 0.0
          %658 = vmatpush1.msra.mxu0 0.0
          %659 = vmatprep.subr.mxu0 0.0
          %660 = vmatpush1.msra.mxu0 0.0
          %661 = vmatprep.subr.mxu0 0.0
          %662 = vmatpush1.msra.mxu0 0.0
          %663 = vmatprep.subr.mxu0 0.0
          %664 = vmatpush1.msra.mxu0 0.0
          %665 = vmatprep.subr.mxu0 0.0
          %666 = vmatpush1.msra.mxu0 0.0
          %667 = vmatprep.subr.mxu0 0.0
          %668 = vmatpush1.msra.mxu0 0.0
          %669 = vmatprep.subr.mxu0 0.0
          %670 = vmatpush1.msra.mxu0 0.0
          %671 = vmatprep.subr.mxu0 0.0
          %672 = vmatpush1.msra.mxu0 0.0
          %673 = vmatprep.subr.mxu0 0.0
          %674 = vmatpush1.msra.mxu0 0.0
          %675 = vmatprep.subr.mxu0 0.0
          %676 = vmatpush1.msra.mxu0 0.0
          %677 = vmatprep.subr.mxu0 0.0
          %678 = vmatpush1.msra.mxu0 0.0
          %679 = vmatprep.subr.mxu0 0.0
          %680 = vmatpush1.msra.mxu0 0.0
          %681 = vmatprep.subr.mxu0 0.0
          %682 = vmatpush1.msra.mxu0 0.0
          %683 = vmatprep.subr.mxu0 0.0
          %684 = vmatpush1.msra.mxu0 0.0
          %685 = vmatprep.subr.mxu0 0.0
          %686 = vmatpush1.msra.mxu0 0.0
          %687 = vmatprep.subr.mxu0 0.0
          %688 = vmatpush1.msra.mxu0 0.0
          %689 = vmatprep.subr.mxu0 0.0
          %690 = vmatpush1.msra.mxu0 0.0
          %691 = vmatprep.mubr.f32.mxu0 0.0
          %692 = vmatmul.mubr.f32.gmra.mrb[0].mxu0 %v625
          %v693 = vpop.f32.mrb[0].mxu0
          %v694 = vadd.f32 0.0, %v693
          %v695 = vpop.f32.mrb[0].mxu0
          %v696 = vadd.f32 0.0, %v695
          %697 = vdwg.mxu0
          %v698 = vmul.f32 %v694, %v614
          %v699 = vmul.f32 %v696, %v614
          %v700 = vld [vmem:[%s396] sm:$0x3]
          %v702 = vlaneseq
          %v703 = vshrl.u32 %v702, 7
          %v704 = vsub.s32 0, %v703
          %v705 = vrot.slane %v700, %v704
          %v706 = vlaneseq
          %v707 = vshrl.u32 %v706, 7
          %v708 = vsub.s32 1, %v707
          %v709 = vrot.slane %v700, %v708
          %v712 = vmul.f32 %v698, %v705
          %v713 = vmul.f32 %v699, %v709
          %v714 = vmax.f32 %v712, %v713
          %v715 = vsub.f32 %v712, %v714
          %v716 = vmul.f32 %v715, 10.0
          %v717 = vmul.f32 %v716, 1.442695
          %v718 = vpow.pop %v717
          %v719 = vadd.f32 %v718, 0.0
          %v720 = vmul.f32 %v712, %v718
          %v721 = vadd.f32 %v720, 0.0
          %v722 = vsub.f32 %v713, %v714
          %v723 = vmul.f32 %v722, 10.0
          %v724 = vmul.f32 %v723, 1.442695
          %v725 = vpow.pop %v724
          %v726 = vadd.f32 %v719, %v725
          %v727 = vmul.f32 %v713, %v725
          %v728 = vadd.f32 %v721, %v727
          %v729 = vrcp.pop %v726
          %v730 = vmul.f32 %v728, %v729
          %v731 = vld [vmem:[%s410] sm:$0xf]
          %732 = vset.pattern.permute.xlu0 0
          %733 = vperm.xlu0 %732, %v731
          %v734 = vpop.permute.xlu0 %733
          %vm735 = vcmp.eq.s32.totalorder %v512, %v734
          %v736 = vsel %vm735, 1, 0
          %v737 = vcvt.s32.f32 %v736
          %v738 = vmul.f32 %v737, 0.01
          %v739 = vsub.f32 %v730, %v738
          %v740 = vmul.f32 %v739, 20.0
          %vm741 = vcmp.lt.s32.totalorder %v512, 8
          %v742 = vsel %vm741, %v740, -1e+30
          %vm743 = vcmask 1043456
          %v744 = vsel %vm743, %v742, -inf
          %745 = vmax.xlane.f32.xlu0 %v744
          %v746 = vpop.xlane.xlu0 %745
          %v747 = vsub.f32 %v742, %v746
          %v748 = vmul.f32 %v747, 1.442695
          %v749 = vpow.pop %v748
          %v750 = vsel %vm743, %v749, 0.0
          %751 = vadd.xlane.f32.xlu0 %v750
          %v752 = vpop.xlane.xlu0 %751
          %v753 = vlog2.pop %v752
          %v754 = vmul.f32 %v753, 0.6931472
          %v755 = vadd.f32 %v754, %v746
          %v756 = vmul.f32 %v742, %v737
          %v757 = vsel %vm743, %v756, 0.0
          %758 = vadd.xlane.f32.xlu0 %v757
          %v759 = vpop.xlane.xlu0 %758
          %v760 = vsub.f32 %v755, %v759
          %v761 = vld [vmem:[%s403] sm:$0xf]
          %v762 = vld [vmem:[#allocation8] sm:$0xf]
          %764 = vset.pattern.permute.xlu0 0
          %765 = vperm.xlu0 %764, %v761
          %v766 = vpop.permute.xlu0 %765
          %v768 = vmul.f32 %v766, %v730
          %v769 = vadd.f32 %v762, %v768
          %770 = vst [vmem:[#allocation8] sm:$0xf] %v769
          %v771 = vld [vmem:[%s414] sm:$0xf]
          %v772 = vmul.f32 %v761, %v760
          %v773 = vadd.f32 %v771, %v772
          %vm774 = vcmask 3072
          %775 = vst.msk [vmem:[%s414] sm:$0xf] %vm774, %v773
        $region60: #{tpu_custom_call.1} parent=39 // pred_fallthru
          _
        %p776 = scmp.lt.s32.totalorder %s30, 0
        %s777 = scalar_select %p776, %s30, 0
        %s778 = smul.addr %s777, 4
        %s779 = scalar_lea.vmem %s6, %s778
        // Predicated region
        $region61: #{tpu_custom_call.1} parent=39 // pred_check
          %p780 = pneg %p200
        $region62: #{tpu_custom_call.1} parent=39 // pred_check_branch
          %782 = sbr.rel (%p780) target = $region64
        $region63: #{tpu_custom_call.1} parent=39 // pred_region
          %s784 = ssub.s32 64, 64
          %785 = vsyncadd [#allocation5], %s784
          %s786 = smul.addr %s30, 64
          %s787 = scalar_lea.hbm %s5, %s786
          %s789 = sshll.u32 [#allocation8], 4
          %s790 = int_to_ptr.vmem [resolvable:$true] %s789
          %792 = dma.vmem_to_hbm [thread:$0]  %s790, 64, %s787, [#allocation5]
        $region64: #{tpu_custom_call.1} parent=39 // pred_fallthru
          _
        // Predicated region
        $region65: #{tpu_custom_call.1} parent=39 // pred_check
          %p793 = pneg %p226
        $region66: #{tpu_custom_call.1} parent=39 // pred_check_branch
          %795 = sbr.rel (%p793) target = $region68
        $region67: #{tpu_custom_call.1} parent=39 // pred_region
          _
        $region68: #{tpu_custom_call.1} parent=39 // pred_fallthru
          _
        // Predicated region
        $region69: #{tpu_custom_call.1} parent=39 // pred_check
          %p796 = pneg %p200
        $region70: #{tpu_custom_call.1} parent=39 // pred_check_branch
          %798 = sbr.rel (%p796) target = $region72
        $region71: #{tpu_custom_call.1} parent=39 // pred_region
          %799 = dma.done [#allocation5], 64
        $region72: #{tpu_custom_call.1} parent=39 // pred_fallthru
          _
        // Predicated region
        $region73: #{tpu_custom_call.1} parent=39 // pred_check
          %p800 = pneg %p226
        $region74: #{tpu_custom_call.1} parent=39 // pred_check_branch
          %802 = sbr.rel (%p800) target = $region76
        $region75: #{tpu_custom_call.1} parent=39 // pred_region
          %p803 = scmp.lt.s32.totalorder %s30, 0
          %s804 = scalar_select %p803, %s30, 0
          %s805 = smul.addr %s804, 4
          %s806 = scalar_lea.vmem %s6, %s805
        $region76: #{tpu_custom_call.1} parent=39 // pred_fallthru
          _
      $region40: #{tpu_custom_call.1} parent=5 // pred_fallthru
        _
      %p807 = scmp.le.s32.totalorder 2, %s20
      // Predicated region
      $region77: #{tpu_custom_call.1} parent=5 // pred_check
        %p808 = pneg %p807
      $region78: #{tpu_custom_call.1} parent=5 // pred_check_branch
        %810 = sbr.rel (%p808) target = $region80
      $region79: #{tpu_custom_call.1} parent=5 // pred_region
        %s811 = ssub.s32 %s20, 2
      $region80: #{tpu_custom_call.1} parent=5 // pred_fallthru
        _
    $region6: #{tpu_custom_call.1} parent=1 // loop_footer
      %s24 = sadd.s32 1, %s20
    $region7: #{tpu_custom_call.1} parent=1 // loop_footer_branch
      %19 = sbr.rel target = $region3
    $region8: #{tpu_custom_call.1} parent=1 // loop_exit
      _
    %812 = vsyncpa [#allocation4], 1
    %s813 = scalar_lea.sflag [#allocation4], 1
    %814 = vsyncpa %s813, 1
    %815 = vsyncpa [#allocation7], 1
    %s816 = scalar_lea.sflag [#allocation7], 1
    %817 = vsyncpa %s816, 1
    %818 = vsyncpa [#allocation5], 1
    %s819 = scalar_lea.sflag [#allocation5], 1
    %820 = vsyncpa %s819, 1

</llo_original>
